<compile_context>
chip_gen: v5e
topology: v5e:2x2
jax: 0.10.0
libtpu: 0.0.40
codegen_flags: <defaults>
</compile_context>

<pallas_src>
import functools

import jax
import jax.numpy as jnp
from jax.experimental import pallas as pl
from jax.experimental.pallas import tpu as pltpu

_ALPHA = 0.2


def _leaky_relu(x, alpha=_ALPHA):
    return jnp.where(x > 0, x, alpha * x)


def _round_up(x, m):
    return ((x + m - 1) // m) * m


def generator_kernel(z_ref, t_ref,
                     w1z_ref, w1t_ref, b1_ref,
                     w2_ref, b2_ref,
                     w3_ref, b3_ref,
                     w4_ref, b4_ref,
                     w5_ref, b5_ref,
                     o_ref):
    """Batch on lanes: z (o_dim, TB), t (1, TB), weights (out, in), biases (out, 1)."""
    z = z_ref[...]                       # (o_dim, TB)
    t = t_ref[...]                       # (1, TB)

    # Layer 1: W1 @ cat(z, t) == W1_z @ z + W1_t * t (contraction dim of t is 1).
    h = jnp.dot(w1z_ref[...], z, preferred_element_type=jnp.float32)
    h = h + w1t_ref[...] * t + b1_ref[...]
    h = _leaky_relu(h)

    h = jnp.dot(w2_ref[...], h, preferred_element_type=jnp.float32) + b2_ref[...]
    h = _leaky_relu(h)

    h = jnp.dot(w3_ref[...], h, preferred_element_type=jnp.float32) + b3_ref[...]
    h = _leaky_relu(h)

    h = jnp.dot(w4_ref[...], h, preferred_element_type=jnp.float32) + b4_ref[...]
    h = _leaky_relu(h)

    out = jnp.dot(w5_ref[...], h, preferred_element_type=jnp.float32) + b5_ref[...]
    o_ref[...] = out.astype(o_ref.dtype)


def init_generator_params(key, o_dim, h_dim):
    """PyTorch-style Linear init: W (out, in), b (out,), uniform +-1/sqrt(fan_in)."""
    dims = [(h_dim, o_dim + 1), (h_dim, h_dim), (h_dim, h_dim),
            (h_dim, h_dim), (o_dim, h_dim)]
    params = []
    for (fan_out, fan_in) in dims:
        key, kw, kb = jax.random.split(key, 3)
        bound = 1.0 / (fan_in ** 0.5)
        w = jax.random.uniform(kw, (fan_out, fan_in), jnp.float32, -bound, bound)
        b = jax.random.uniform(kb, (fan_out,), jnp.float32, -bound, bound)
        params.append((w, b))
    return params


@functools.partial(jax.jit, static_argnames=("tile_b",))
def generator_forward(z, t, params, tile_b=1024):
    """z: (B, o_dim) f32, t: (B, 1) f32 -> (B, o_dim) f32."""
    B, o_dim = z.shape
    (w1, b1), (w2, b2), (w3, b3), (w4, b4), (w5, b5) = params
    h_dim = w1.shape[0]

    # Kernel layout: batch on the 128-lane axis, features on sublanes.
    zT = z.T                              # (o_dim, B)
    tT = t.T                              # (1, B)
    tb = min(tile_b, _round_up(B, 128))   # lane-aligned tile, sized per VMEM (safe on v7x too)
    B_pad = _round_up(B, tb)
    if B_pad != B:
        zT = jnp.pad(zT, ((0, 0), (0, B_pad - B)))
        tT = jnp.pad(tT, ((0, 0), (0, B_pad - B)))

    # Split layer-1 weight so cat(z, t) never exists in HBM.
    w1z = w1[:, :o_dim]                   # (h_dim, o_dim)
    w1t = w1[:, o_dim:]                   # (h_dim, 1)
    b1c = b1.reshape(h_dim, 1)
    b2c = b2.reshape(h_dim, 1)
    b3c = b3.reshape(h_dim, 1)
    b4c = b4.reshape(h_dim, 1)
    b5c = b5.reshape(o_dim, 1)

    grid = (B_pad // tb,)

    def batch_block(feat):
        # Blocked along the batch (lane) axis -> double-buffered by the pipeline.
        return pl.BlockSpec((feat, tb), lambda i: (0, i))

    def full_block(shape):
        # Whole (tiny) array resident in VMEM; constant index map -> loaded once.
        return pl.BlockSpec(shape, lambda i: (0, 0))

    flops = 2 * B_pad * ((o_dim + 1) * h_dim + 3 * h_dim * h_dim + h_dim * o_dim)
    weight_bytes = 4 * (w1.size + w2.size + w3.size + w4.size + w5.size
                        + b1.size + b2.size + b3.size + b4.size + b5.size)
    bytes_accessed = 4 * B_pad * (2 * o_dim + 1) + weight_bytes

    out_pad = pl.pallas_call(
        generator_kernel,
        out_shape=jax.ShapeDtypeStruct((o_dim, B_pad), jnp.float32),
        grid=grid,
        in_specs=[
            batch_block(o_dim),           # z
            batch_block(1),               # t
            full_block(w1z.shape),
            full_block(w1t.shape),
            full_block(b1c.shape),
            full_block(w2.shape),
            full_block(b2c.shape),
            full_block(w3.shape),
            full_block(b3c.shape),
            full_block(w4.shape),
            full_block(b4c.shape),
            full_block(w5.shape),
            full_block(b5c.shape),
        ],
        out_specs=batch_block(o_dim),
        compiler_params=pltpu.CompilerParams(
            dimension_semantics=("parallel",),      # megacore sharding on v7x
            vmem_limit_bytes=32 * 1024 * 1024,      # safe on v5e/v6e/v7x
        ),
        cost_estimate=pl.CostEstimate(
            flops=flops, transcendentals=0, bytes_accessed=bytes_accessed),
    )(zT, tT, w1z, w1t, b1c, w2, b2c, w3, b3c, w4, b4c, w5, b5c)

    # Strip batch padding and return to (B, o_dim) row-major layout.
    return out_pad[:, :B].T


def generator_reference(z, t, params):
    """Pure-JAX reference mirroring the PyTorch module exactly."""
    x = jnp.concatenate([z, t], axis=1)
    for i, (w, b) in enumerate(params):
        x = x @ w.T + b
        if i < len(params) - 1:
            x = jnp.where(x > 0, x, _ALPHA * x)
    return x


if __name__ == "__main__":
    B, o_dim, h_dim = 8, 4, 32

    key = jax.random.PRNGKey(0)
    kz, kt, kp = jax.random.split(key, 3)

    z = jax.random.normal(kz, (B, o_dim), jnp.float32)
    t = jax.random.normal(kt, (B, 1), jnp.float32)
    params = init_generator_params(kp, o_dim, h_dim)

    out = generator_forward(z, t, params)
    out = jax.block_until_ready(out)

    ref = generator_reference(z, t, params)
    assert out.shape == (B, o_dim)
    assert jnp.allclose(out, ref, atol=1e-5, rtol=1e-5)

    print("KERNEL_OK")
</pallas_src>

<mosaic_0001>
module attributes {stable_mosaic.version = 11 : i64} {
  func.func @generator_kernel(%arg0: i32, %arg1: memref<4x128xf32, #tpu.memory_space<vmem>>, %arg2: memref<1x128xf32, #tpu.memory_space<vmem>>, %arg3: memref<32x4xf32, #tpu.memory_space<vmem>>, %arg4: memref<32x1xf32, #tpu.memory_space<vmem>>, %arg5: memref<32x1xf32, #tpu.memory_space<vmem>>, %arg6: memref<32x32xf32, #tpu.memory_space<vmem>>, %arg7: memref<32x1xf32, #tpu.memory_space<vmem>>, %arg8: memref<32x32xf32, #tpu.memory_space<vmem>>, %arg9: memref<32x1xf32, #tpu.memory_space<vmem>>, %arg10: memref<32x32xf32, #tpu.memory_space<vmem>>, %arg11: memref<32x1xf32, #tpu.memory_space<vmem>>, %arg12: memref<4x32xf32, #tpu.memory_space<vmem>>, %arg13: memref<4x1xf32, #tpu.memory_space<vmem>>, %arg14: memref<4x128xf32, #tpu.memory_space<vmem>>) attributes {dimension_semantics = [#tpu.dimension_semantics<parallel>], iteration_bounds = array<i64: 1>, scalar_prefetch = 0 : i64, scratch_operands = 0 : i64, tpu.core_type = #tpu.core_type<tc>, window_params = [{transform_indices = @transform_0, window_bounds = array<i64: 4, 128>}, {transform_indices = @transform_1, window_bounds = array<i64: 1, 128>}, {pipeline_mode = #tpu.pipeline_mode<synchronous>, transform_indices = @transform_2, window_bounds = array<i64: 32, 4>}, {pipeline_mode = #tpu.pipeline_mode<synchronous>, transform_indices = @transform_3, window_bounds = array<i64: 32, 1>}, {pipeline_mode = #tpu.pipeline_mode<synchronous>, transform_indices = @transform_4, window_bounds = array<i64: 32, 1>}, {pipeline_mode = #tpu.pipeline_mode<synchronous>, transform_indices = @transform_5, window_bounds = array<i64: 32, 32>}, {pipeline_mode = #tpu.pipeline_mode<synchronous>, transform_indices = @transform_6, window_bounds = array<i64: 32, 1>}, {pipeline_mode = #tpu.pipeline_mode<synchronous>, transform_indices = @transform_7, window_bounds = array<i64: 32, 32>}, {pipeline_mode = #tpu.pipeline_mode<synchronous>, transform_indices = @transform_8, window_bounds = array<i64: 32, 1>}, {pipeline_mode = #tpu.pipeline_mode<synchronous>, transform_indices = @transform_9, window_bounds = array<i64: 32, 32>}, {pipeline_mode = #tpu.pipeline_mode<synchronous>, transform_indices = @transform_10, window_bounds = array<i64: 32, 1>}, {pipeline_mode = #tpu.pipeline_mode<synchronous>, transform_indices = @transform_11, window_bounds = array<i64: 4, 32>}, {pipeline_mode = #tpu.pipeline_mode<synchronous>, transform_indices = @transform_12, window_bounds = array<i64: 4, 1>}, {transform_indices = @transform_13, window_bounds = array<i64: 4, 128>}]} {
    %c0 = arith.constant 0 : index
    %c0_0 = arith.constant 0 : index
    %0 = vector.load %arg1[%c0, %c0_0] : memref<4x128xf32, #tpu.memory_space<vmem>>, vector<4x128xf32>
    %c0_1 = arith.constant 0 : index
    %c0_2 = arith.constant 0 : index
    %1 = vector.load %arg2[%c0_1, %c0_2] : memref<1x128xf32, #tpu.memory_space<vmem>>, vector<1x128xf32>
    %c0_3 = arith.constant 0 : index
    %c0_4 = arith.constant 0 : index
    %2 = vector.load %arg3[%c0_3, %c0_4] : memref<32x4xf32, #tpu.memory_space<vmem>>, vector<32x4xf32>
    %cst = arith.constant dense<0.000000e+00> : vector<32x128xf32>
    %3 = tpu.matmul %2, %0, %cst {dimension_numbers = #tpu.dot_dimension_numbers<[1], [0], [0], [1], [0, 0, 1, 1], [], []>} : vector<32x4xf32>, vector<4x128xf32>, vector<32x128xf32> -> vector<32x128xf32>
    %c0_5 = arith.constant 0 : index
    %c0_6 = arith.constant 0 : index
    %4 = vector.load %arg4[%c0_5, %c0_6] : memref<32x1xf32, #tpu.memory_space<vmem>>, vector<32x1xf32>
    %5 = vector.broadcast %4 : vector<32x1xf32> to vector<32x128xf32>
    %6 = vector.broadcast %1 : vector<1x128xf32> to vector<32x128xf32>
    %7 = arith.mulf %5, %6 : vector<32x128xf32>
    %8 = arith.addf %3, %7 : vector<32x128xf32>
    %c0_7 = arith.constant 0 : index
    %c0_8 = arith.constant 0 : index
    %9 = vector.load %arg5[%c0_7, %c0_8] : memref<32x1xf32, #tpu.memory_space<vmem>>, vector<32x1xf32>
    %10 = vector.broadcast %9 : vector<32x1xf32> to vector<32x128xf32>
    %11 = arith.addf %8, %10 : vector<32x128xf32>
    %cst_9 = arith.constant 0.000000e+00 : f32
    %12 = vector.broadcast %cst_9 : f32 to vector<32x128xf32>
    %13 = arith.cmpf ogt, %11, %12 : vector<32x128xf32>
    %cst_10 = arith.constant 2.000000e-01 : f32
    %14 = vector.broadcast %cst_10 : f32 to vector<32x128xf32>
    %15 = arith.mulf %14, %11 : vector<32x128xf32>
    %16 = arith.select %13, %11, %15 : vector<32x128xi1>, vector<32x128xf32>
    %c0_11 = arith.constant 0 : index
    %c0_12 = arith.constant 0 : index
    %17 = vector.load %arg6[%c0_11, %c0_12] : memref<32x32xf32, #tpu.memory_space<vmem>>, vector<32x32xf32>
    %cst_13 = arith.constant dense<0.000000e+00> : vector<32x128xf32>
    %18 = tpu.matmul %17, %16, %cst_13 {dimension_numbers = #tpu.dot_dimension_numbers<[1], [0], [0], [1], [0, 0, 1, 1], [], []>} : vector<32x32xf32>, vector<32x128xf32>, vector<32x128xf32> -> vector<32x128xf32>
    %c0_14 = arith.constant 0 : index
    %c0_15 = arith.constant 0 : index
    %19 = vector.load %arg7[%c0_14, %c0_15] : memref<32x1xf32, #tpu.memory_space<vmem>>, vector<32x1xf32>
    %20 = vector.broadcast %19 : vector<32x1xf32> to vector<32x128xf32>
    %21 = arith.addf %18, %20 : vector<32x128xf32>
    %cst_16 = arith.constant 0.000000e+00 : f32
    %22 = vector.broadcast %cst_16 : f32 to vector<32x128xf32>
    %23 = arith.cmpf ogt, %21, %22 : vector<32x128xf32>
    %cst_17 = arith.constant 2.000000e-01 : f32
    %24 = vector.broadcast %cst_17 : f32 to vector<32x128xf32>
    %25 = arith.mulf %24, %21 : vector<32x128xf32>
    %26 = arith.select %23, %21, %25 : vector<32x128xi1>, vector<32x128xf32>
    %c0_18 = arith.constant 0 : index
    %c0_19 = arith.constant 0 : index
    %27 = vector.load %arg8[%c0_18, %c0_19] : memref<32x32xf32, #tpu.memory_space<vmem>>, vector<32x32xf32>
    %cst_20 = arith.constant dense<0.000000e+00> : vector<32x128xf32>
    %28 = tpu.matmul %27, %26, %cst_20 {dimension_numbers = #tpu.dot_dimension_numbers<[1], [0], [0], [1], [0, 0, 1, 1], [], []>} : vector<32x32xf32>, vector<32x128xf32>, vector<32x128xf32> -> vector<32x128xf32>
    %c0_21 = arith.constant 0 : index
    %c0_22 = arith.constant 0 : index
    %29 = vector.load %arg9[%c0_21, %c0_22] : memref<32x1xf32, #tpu.memory_space<vmem>>, vector<32x1xf32>
    %30 = vector.broadcast %29 : vector<32x1xf32> to vector<32x128xf32>
    %31 = arith.addf %28, %30 : vector<32x128xf32>
    %cst_23 = arith.constant 0.000000e+00 : f32
    %32 = vector.broadcast %cst_23 : f32 to vector<32x128xf32>
    %33 = arith.cmpf ogt, %31, %32 : vector<32x128xf32>
    %cst_24 = arith.constant 2.000000e-01 : f32
    %34 = vector.broadcast %cst_24 : f32 to vector<32x128xf32>
    %35 = arith.mulf %34, %31 : vector<32x128xf32>
    %36 = arith.select %33, %31, %35 : vector<32x128xi1>, vector<32x128xf32>
    %c0_25 = arith.constant 0 : index
    %c0_26 = arith.constant 0 : index
    %37 = vector.load %arg10[%c0_25, %c0_26] : memref<32x32xf32, #tpu.memory_space<vmem>>, vector<32x32xf32>
    %cst_27 = arith.constant dense<0.000000e+00> : vector<32x128xf32>
    %38 = tpu.matmul %37, %36, %cst_27 {dimension_numbers = #tpu.dot_dimension_numbers<[1], [0], [0], [1], [0, 0, 1, 1], [], []>} : vector<32x32xf32>, vector<32x128xf32>, vector<32x128xf32> -> vector<32x128xf32>
    %c0_28 = arith.constant 0 : index
    %c0_29 = arith.constant 0 : index
    %39 = vector.load %arg11[%c0_28, %c0_29] : memref<32x1xf32, #tpu.memory_space<vmem>>, vector<32x1xf32>
    %40 = vector.broadcast %39 : vector<32x1xf32> to vector<32x128xf32>
    %41 = arith.addf %38, %40 : vector<32x128xf32>
    %cst_30 = arith.constant 0.000000e+00 : f32
    %42 = vector.broadcast %cst_30 : f32 to vector<32x128xf32>
    %43 = arith.cmpf ogt, %41, %42 : vector<32x128xf32>
    %cst_31 = arith.constant 2.000000e-01 : f32
    %44 = vector.broadcast %cst_31 : f32 to vector<32x128xf32>
    %45 = arith.mulf %44, %41 : vector<32x128xf32>
    %46 = arith.select %43, %41, %45 : vector<32x128xi1>, vector<32x128xf32>
    %c0_32 = arith.constant 0 : index
    %c0_33 = arith.constant 0 : index
    %47 = vector.load %arg12[%c0_32, %c0_33] : memref<4x32xf32, #tpu.memory_space<vmem>>, vector<4x32xf32>
    %cst_34 = arith.constant dense<0.000000e+00> : vector<4x128xf32>
    %48 = tpu.matmul %47, %46, %cst_34 {dimension_numbers = #tpu.dot_dimension_numbers<[1], [0], [0], [1], [0, 0, 1, 1], [], []>} : vector<4x32xf32>, vector<32x128xf32>, vector<4x128xf32> -> vector<4x128xf32>
    %c0_35 = arith.constant 0 : index
    %c0_36 = arith.constant 0 : index
    %49 = vector.load %arg13[%c0_35, %c0_36] : memref<4x1xf32, #tpu.memory_space<vmem>>, vector<4x1xf32>
    %50 = vector.broadcast %49 : vector<4x1xf32> to vector<4x128xf32>
    %51 = arith.addf %48, %50 : vector<4x128xf32>
    %c0_37 = arith.constant 0 : index
    %c0_38 = arith.constant 0 : index
    %52 = vector.load %arg14[%c0_37, %c0_38] : memref<4x128xf32, #tpu.memory_space<vmem>>, vector<4x128xf32>
    tpu.vector_store %arg14[%c0_37, %c0_38], %51 {strides = array<i32>} : memref<4x128xf32, #tpu.memory_space<vmem>>, vector<4x128xf32>,
    return
  }
  func.func @transform_0(%arg0: i32) -> (i32, i32) {
    %c0_i32 = arith.constant 0 : i32
    %c0_i32_0 = arith.constant 0 : i32
    return %c0_i32, %arg0 : i32, i32
  }
  func.func @transform_1(%arg0: i32) -> (i32, i32) {
    %c0_i32 = arith.constant 0 : i32
    %c0_i32_0 = arith.constant 0 : i32
    return %c0_i32, %arg0 : i32, i32
  }
  func.func @transform_2(%arg0: i32) -> (i32, i32) {
    %c0_i32 = arith.constant 0 : i32
    %c0_i32_0 = arith.constant 0 : i32
    %c0_i32_1 = arith.constant 0 : i32
    return %c0_i32, %c0_i32_0 : i32, i32
  }
  func.func @transform_3(%arg0: i32) -> (i32, i32) {
    %c0_i32 = arith.constant 0 : i32
    %c0_i32_0 = arith.constant 0 : i32
    %c0_i32_1 = arith.constant 0 : i32
    return %c0_i32, %c0_i32_0 : i32, i32
  }
  func.func @transform_4(%arg0: i32) -> (i32, i32) {
    %c0_i32 = arith.constant 0 : i32
    %c0_i32_0 = arith.constant 0 : i32
    %c0_i32_1 = arith.constant 0 : i32
    return %c0_i32, %c0_i32_0 : i32, i32
  }
  func.func @transform_5(%arg0: i32) -> (i32, i32) {
    %c0_i32 = arith.constant 0 : i32
    %c0_i32_0 = arith.constant 0 : i32
    %c0_i32_1 = arith.constant 0 : i32
    return %c0_i32, %c0_i32_0 : i32, i32
  }
  func.func @transform_6(%arg0: i32) -> (i32, i32) {
    %c0_i32 = arith.constant 0 : i32
    %c0_i32_0 = arith.constant 0 : i32
    %c0_i32_1 = arith.constant 0 : i32
    return %c0_i32, %c0_i32_0 : i32, i32
  }
  func.func @transform_7(%arg0: i32) -> (i32, i32) {
    %c0_i32 = arith.constant 0 : i32
    %c0_i32_0 = arith.constant 0 : i32
    %c0_i32_1 = arith.constant 0 : i32
    return %c0_i32, %c0_i32_0 : i32, i32
  }
  func.func @transform_8(%arg0: i32) -> (i32, i32) {
    %c0_i32 = arith.constant 0 : i32
    %c0_i32_0 = arith.constant 0 : i32
    %c0_i32_1 = arith.constant 0 : i32
    return %c0_i32, %c0_i32_0 : i32, i32
  }
  func.func @transform_9(%arg0: i32) -> (i32, i32) {
    %c0_i32 = arith.constant 0 : i32
    %c0_i32_0 = arith.constant 0 : i32
    %c0_i32_1 = arith.constant 0 : i32
    return %c0_i32, %c0_i32_0 : i32, i32
  }
  func.func @transform_10(%arg0: i32) -> (i32, i32) {
    %c0_i32 = arith.constant 0 : i32
    %c0_i32_0 = arith.constant 0 : i32
    %c0_i32_1 = arith.constant 0 : i32
    return %c0_i32, %c0_i32_0 : i32, i32
  }
  func.func @transform_11(%arg0: i32) -> (i32, i32) {
    %c0_i32 = arith.constant 0 : i32
    %c0_i32_0 = arith.constant 0 : i32
    %c0_i32_1 = arith.constant 0 : i32
    return %c0_i32, %c0_i32_0 : i32, i32
  }
  func.func @transform_12(%arg0: i32) -> (i32, i32) {
    %c0_i32 = arith.constant 0 : i32
    %c0_i32_0 = arith.constant 0 : i32
    %c0_i32_1 = arith.constant 0 : i32
    return %c0_i32, %c0_i32_0 : i32, i32
  }
  func.func @transform_13(%arg0: i32) -> (i32, i32) {
    %c0_i32 = arith.constant 0 : i32
    %c0_i32_0 = arith.constant 0 : i32
    return %c0_i32, %arg0 : i32, i32
  }
}

</mosaic_0001>

<llo_original>
// kernel: generator_forward.1
$region0: #{generator_forward.1}
  #allocation0 [shape = 'u32[]', space=smem, size = 0x4, offset = 0x4, fixed_abs, tag = 'smem constant byte address 0x4 - core index']
  #allocation1 [shape = 'u32[72,128]{1,0:T(1,128)}', space=vmem, size = 0x9000, scoped, tag = 'internal scratch']
  %s0 = inlined_call_operand.vmem [shape: f32[4,128], index: 0, kind: input, shape index: {}]
  %s1 = inlined_call_operand.vmem [shape: f32[1,128], index: 1, kind: input, shape index: {}]
  %s2 = inlined_call_operand.vmem [shape: f32[32,4], index: 2, kind: input, shape index: {}]
  %s3 = inlined_call_operand.vmem [shape: f32[32,1], index: 3, kind: input, shape index: {}]
  %s4 = inlined_call_operand.vmem [shape: f32[32,1], index: 4, kind: input, shape index: {}]
  %s5 = inlined_call_operand.vmem [shape: f32[32,32], index: 5, kind: input, shape index: {}]
  %s6 = inlined_call_operand.vmem [shape: f32[32,1], index: 6, kind: input, shape index: {}]
  %s7 = inlined_call_operand.vmem [shape: f32[32,32], index: 7, kind: input, shape index: {}]
  %s8 = inlined_call_operand.vmem [shape: f32[32,1], index: 8, kind: input, shape index: {}]
  %s9 = inlined_call_operand.vmem [shape: f32[32,32], index: 9, kind: input, shape index: {}]
  %s10 = inlined_call_operand.vmem [shape: f32[32,1], index: 10, kind: input, shape index: {}]
  %s11 = inlined_call_operand.vmem [shape: f32[4,32], index: 11, kind: input, shape index: {}]
  %s12 = inlined_call_operand.vmem [shape: f32[4,1], index: 12, kind: input, shape index: {}]
  %s13 = inlined_call_operand.vmem [shape: f32[4,128], index: 13, kind: output, shape index: {}]
  %s14 = sld [smem:[#allocation0]]
  $region62: #{generator_forward.1} parent=0
    _
  %s16 = ssub.s32 1, %s14
  %s17 = scalar_select 0, %s16, %s14
  // Predicated region
  $region2: #{generator_forward.1} parent=0 // pred_check
    _
  $region3: #{generator_forward.1} parent=0 // pred_check_branch
    %19 = sbr.rel (0) target = $region5
  $region4: #{generator_forward.1} parent=0 // pred_region
    _
  $region5: #{generator_forward.1} parent=0 // pred_fallthru
    _
  // Predicated region
  $region6: #{generator_forward.1} parent=0 // pred_check
    _
  $region7: #{generator_forward.1} parent=0 // pred_check_branch
    %21 = sbr.rel (0) target = $region9
  $region8: #{generator_forward.1} parent=0 // pred_region
    _
  $region9: #{generator_forward.1} parent=0 // pred_fallthru
    _
  // Predicated region
  $region10: #{generator_forward.1} parent=0 // pred_check
    _
  $region11: #{generator_forward.1} parent=0 // pred_check_branch
    %23 = sbr.rel (0) target = $region13
  $region12: #{generator_forward.1} parent=0 // pred_region
    _
  $region13: #{generator_forward.1} parent=0 // pred_fallthru
    _
  // Predicated region
  $region14: #{generator_forward.1} parent=0 // pred_check
    _
  $region15: #{generator_forward.1} parent=0 // pred_check_branch
    %25 = sbr.rel (0) target = $region17
  $region16: #{generator_forward.1} parent=0 // pred_region
    _
  $region17: #{generator_forward.1} parent=0 // pred_fallthru
    _
  // Predicated region
  $region18: #{generator_forward.1} parent=0 // pred_check
    _
  $region19: #{generator_forward.1} parent=0 // pred_check_branch
    %27 = sbr.rel (0) target = $region21
  $region20: #{generator_forward.1} parent=0 // pred_region
    _
  $region21: #{generator_forward.1} parent=0 // pred_fallthru
    _
  // Predicated region
  $region22: #{generator_forward.1} parent=0 // pred_check
    _
  $region23: #{generator_forward.1} parent=0 // pred_check_branch
    %29 = sbr.rel (0) target = $region25
  $region24: #{generator_forward.1} parent=0 // pred_region
    _
  $region25: #{generator_forward.1} parent=0 // pred_fallthru
    _
  // Predicated region
  $region26: #{generator_forward.1} parent=0 // pred_check
    _
  $region27: #{generator_forward.1} parent=0 // pred_check_branch
    %31 = sbr.rel (0) target = $region29
  $region28: #{generator_forward.1} parent=0 // pred_region
    _
  $region29: #{generator_forward.1} parent=0 // pred_fallthru
    _
  // Predicated region
  $region30: #{generator_forward.1} parent=0 // pred_check
    _
  $region31: #{generator_forward.1} parent=0 // pred_check_branch
    %33 = sbr.rel (0) target = $region33
  $region32: #{generator_forward.1} parent=0 // pred_region
    _
  $region33: #{generator_forward.1} parent=0 // pred_fallthru
    _
  // Predicated region
  $region34: #{generator_forward.1} parent=0 // pred_check
    _
  $region35: #{generator_forward.1} parent=0 // pred_check_branch
    %35 = sbr.rel (0) target = $region37
  $region36: #{generator_forward.1} parent=0 // pred_region
    _
  $region37: #{generator_forward.1} parent=0 // pred_fallthru
    _
  // Predicated region
  $region38: #{generator_forward.1} parent=0 // pred_check
    _
  $region39: #{generator_forward.1} parent=0 // pred_check_branch
    %37 = sbr.rel (0) target = $region41
  $region40: #{generator_forward.1} parent=0 // pred_region
    _
  $region41: #{generator_forward.1} parent=0 // pred_fallthru
    _
  // Predicated region
  $region42: #{generator_forward.1} parent=0 // pred_check
    _
  $region43: #{generator_forward.1} parent=0 // pred_check_branch
    %39 = sbr.rel (0) target = $region45
  $region44: #{generator_forward.1} parent=0 // pred_region
    _
  $region45: #{generator_forward.1} parent=0 // pred_fallthru
    _
  // Predicated region
  $region46: #{generator_forward.1} parent=0 // pred_check
    _
  $region47: #{generator_forward.1} parent=0 // pred_check_branch
    %41 = sbr.rel (0) target = $region49
  $region48: #{generator_forward.1} parent=0 // pred_region
    _
  $region49: #{generator_forward.1} parent=0 // pred_fallthru
    _
  // Predicated region
  $region50: #{generator_forward.1} parent=0 // pred_check
    _
  $region51: #{generator_forward.1} parent=0 // pred_check_branch
    %43 = sbr.rel (0) target = $region53
  $region52: #{generator_forward.1} parent=0 // pred_region
    _
  $region53: #{generator_forward.1} parent=0 // pred_fallthru
    _
  %v44 = vld [vmem:[%s0] sm:$0xf]
  %v45 = vld [vmem:[%s1] sm:$0x1]
  %v46 = vld [vmem:[%s2] sm:$0xff]
  %v47 = vld [vmem:[%s2 + $0x8] sm:$0xff]
  %v48 = vld [vmem:[%s2 + $0x10] sm:$0xff]
  %v49 = vld [vmem:[%s2 + $0x18] sm:$0xff]
  %v50 = vld [vmem:[%s3] sm:$0xff]
  %v51 = vld [vmem:[%s3 + $0x8] sm:$0xff]
  %v52 = vld [vmem:[%s3 + $0x10] sm:$0xff]
  %v53 = vld [vmem:[%s3 + $0x18] sm:$0xff]
  %55 = vset.pattern.permute.xlu0 0
  %56 = vperm.xlu0 %55, %v50
  %v57 = vpop.permute.xlu0 %56
  %60 = vset.pattern.permute.xlu0 0
  %61 = vperm.xlu0 %60, %v51
  %v62 = vpop.permute.xlu0 %61
  %65 = vset.pattern.permute.xlu0 0
  %66 = vperm.xlu0 %65, %v52
  %v67 = vpop.permute.xlu0 %66
  %70 = vset.pattern.permute.xlu0 0
  %71 = vperm.xlu0 %70, %v53
  %v72 = vpop.permute.xlu0 %71
  %v75 = vperm.slane %v45, 0
  %v77 = vmul.f32 %v57, %v75
  %v78 = vmul.f32 %v62, %v75
  %v79 = vmul.f32 %v67, %v75
  %v80 = vmul.f32 %v72, %v75
  %vm81 = vcmask 31744
  %v83 = vsel %vm81, %v46, 0
  %v86 = vsel %vm81, %v47, 0
  %v89 = vsel %vm81, %v48, 0
  %v92 = vsel %vm81, %v49, 0
  %vm94 = vcmask 1043456
  %v96 = vsel %vm94, %v44, 0
  %98 = vmatpush.msra.mxu0 0.0
  %99 = vmatpush.msra.mxu0 0.0
  %100 = vmatpush.msra.mxu0 0.0
  %101 = vmatpush.msra.mxu0 0.0
  %102 = vmatpush.msra.mxu0 0.0
  %103 = vmatpush.msra.mxu0 0.0
  %104 = vmatpush.msra.mxu0 0.0
  %105 = vmatpush.msra.mxu0 0.0
  %106 = vmatpush.msra.mxu0 0.0
  %107 = vmatpush.msra.mxu0 0.0
  %108 = vmatpush.msra.mxu0 0.0
  %109 = vmatpush.msra.mxu0 0.0
  %110 = vmatpush.msra.mxu0 0.0
  %111 = vmatpush.msra.mxu0 0.0
  %112 = vmatpush.msra.mxu0 0.0
  %113 = vmatpush.msra.mxu0 %v96
  %114 = vmatmul.f32.gmra.mxu0 %v83
  %v115 = vpop.f32.mrf.mxu0
  %v116 = vadd.f32 %v77, %v115
  %117 = vmatmul.f32.gmra.mxu0 %v86
  %v118 = vpop.f32.mrf.mxu0
  %v119 = vadd.f32 %v78, %v118
  %120 = vmatmul.f32.gmra.mxu0 %v89
  %v121 = vpop.f32.mrf.mxu0
  %v122 = vadd.f32 %v79, %v121
  %123 = vmatmul.f32.gmra.mxu0 %v92
  %v124 = vpop.f32.mrf.mxu0
  %v125 = vadd.f32 %v80, %v124
  %126 = vdwg.mxu0
  %v127 = vld [vmem:[%s4] sm:$0xff]
  %v128 = vld [vmem:[%s4 + $0x8] sm:$0xff]
  %v129 = vld [vmem:[%s4 + $0x10] sm:$0xff]
  %v130 = vld [vmem:[%s4 + $0x18] sm:$0xff]
  %132 = vset.pattern.permute.xlu0 0
  %133 = vperm.xlu0 %132, %v127
  %v134 = vpop.permute.xlu0 %133
  %137 = vset.pattern.permute.xlu0 0
  %138 = vperm.xlu0 %137, %v128
  %v139 = vpop.permute.xlu0 %138
  %142 = vset.pattern.permute.xlu0 0
  %143 = vperm.xlu0 %142, %v129
  %v144 = vpop.permute.xlu0 %143
  %147 = vset.pattern.permute.xlu0 0
  %148 = vperm.xlu0 %147, %v130
  %v149 = vpop.permute.xlu0 %148
  %v151 = vadd.f32 %v116, %v134
  %v152 = vadd.f32 %v119, %v139
  %v153 = vadd.f32 %v122, %v144
  %v154 = vadd.f32 %v125, %v149
  %vm155 = vcmp.gt.f32.partialorder %v151, 0.0
  %vm156 = vcmp.gt.f32.partialorder %v152, 0.0
  %vm157 = vcmp.gt.f32.partialorder %v153, 0.0
  %vm158 = vcmp.gt.f32.partialorder %v154, 0.0
  %v159 = vmul.f32 %v151, 0.2
  %v160 = vmul.f32 %v152, 0.2
  %v161 = vmul.f32 %v153, 0.2
  %v162 = vmul.f32 %v154, 0.2
  %v163 = vsel %vm155, %v151, %v159
  %v164 = vsel %vm156, %v152, %v160
  %v165 = vsel %vm157, %v153, %v161
  %v166 = vsel %vm158, %v154, %v162
  %v167 = vld [vmem:[%s5] sm:$0xff]
  %v168 = vld [vmem:[%s5 + $0x8] sm:$0xff]
  %v169 = vld [vmem:[%s5 + $0x10] sm:$0xff]
  %v170 = vld [vmem:[%s5 + $0x18] sm:$0xff]
  %v171 = vld [vmem:[%s6] sm:$0xff]
  %v172 = vld [vmem:[%s6 + $0x8] sm:$0xff]
  %v173 = vld [vmem:[%s6 + $0x10] sm:$0xff]
  %v174 = vld [vmem:[%s6 + $0x18] sm:$0xff]
  %176 = vset.pattern.permute.xlu0 0
  %177 = vperm.xlu0 %176, %v171
  %v178 = vpop.permute.xlu0 %177
  %181 = vset.pattern.permute.xlu0 0
  %182 = vperm.xlu0 %181, %v172
  %v183 = vpop.permute.xlu0 %182
  %186 = vset.pattern.permute.xlu0 0
  %187 = vperm.xlu0 %186, %v173
  %v188 = vpop.permute.xlu0 %187
  %191 = vset.pattern.permute.xlu0 0
  %192 = vperm.xlu0 %191, %v174
  %v193 = vpop.permute.xlu0 %192
  %vm195 = vcmask 261120
  %v197 = vsel %vm195, %v167, 0
  %v200 = vsel %vm195, %v168, 0
  %v203 = vsel %vm195, %v169, 0
  %v206 = vsel %vm195, %v170, 0
  %208 = vmatpush.msra.mxu0 0.0
  %209 = vmatpush.msra.mxu0 0.0
  %210 = vmatpush.msra.mxu0 0.0
  %211 = vmatpush.msra.mxu0 0.0
  %212 = vmatpush.msra.mxu0 0.0
  %213 = vmatpush.msra.mxu0 0.0
  %214 = vmatpush.msra.mxu0 0.0
  %215 = vmatpush.msra.mxu0 0.0
  %216 = vmatpush.msra.mxu0 0.0
  %217 = vmatpush.msra.mxu0 0.0
  %218 = vmatpush.msra.mxu0 0.0
  %219 = vmatpush.msra.mxu0 0.0
  %220 = vmatpush.msra.mxu0 %v166
  %221 = vmatpush.msra.mxu0 %v165
  %222 = vmatpush.msra.mxu0 %v164
  %223 = vmatpush.msra.mxu0 %v163
  %224 = vmatmul.f32.gmra.mxu0 %v197
  %v225 = vpop.f32.mrf.mxu0
  %v226 = vadd.f32 %v178, %v225
  %227 = vmatmul.f32.gmra.mxu0 %v200
  %v228 = vpop.f32.mrf.mxu0
  %v229 = vadd.f32 %v183, %v228
  %230 = vmatmul.f32.gmra.mxu0 %v203
  %v231 = vpop.f32.mrf.mxu0
  %v232 = vadd.f32 %v188, %v231
  %233 = vmatmul.f32.gmra.mxu0 %v206
  %v234 = vpop.f32.mrf.mxu0
  %v235 = vadd.f32 %v193, %v234
  %236 = vdwg.mxu0
  %vm237 = vcmp.gt.f32.partialorder %v226, 0.0
  %vm238 = vcmp.gt.f32.partialorder %v229, 0.0
  %vm239 = vcmp.gt.f32.partialorder %v232, 0.0
  %vm240 = vcmp.gt.f32.partialorder %v235, 0.0
  %v241 = vmul.f32 %v226, 0.2
  %v242 = vmul.f32 %v229, 0.2
  %v243 = vmul.f32 %v232, 0.2
  %v244 = vmul.f32 %v235, 0.2
  %v245 = vsel %vm237, %v226, %v241
  %v246 = vsel %vm238, %v229, %v242
  %v247 = vsel %vm239, %v232, %v243
  %v248 = vsel %vm240, %v235, %v244
  %v249 = vld [vmem:[%s7] sm:$0xff]
  %v250 = vld [vmem:[%s7 + $0x8] sm:$0xff]
  %v251 = vld [vmem:[%s7 + $0x10] sm:$0xff]
  %v252 = vld [vmem:[%s7 + $0x18] sm:$0xff]
  %v253 = vld [vmem:[%s8] sm:$0xff]
  %v254 = vld [vmem:[%s8 + $0x8] sm:$0xff]
  %v255 = vld [vmem:[%s8 + $0x10] sm:$0xff]
  %v256 = vld [vmem:[%s8 + $0x18] sm:$0xff]
  %258 = vset.pattern.permute.xlu0 0
  %259 = vperm.xlu0 %258, %v253
  %v260 = vpop.permute.xlu0 %259
  %263 = vset.pattern.permute.xlu0 0
  %264 = vperm.xlu0 %263, %v254
  %v265 = vpop.permute.xlu0 %264
  %268 = vset.pattern.permute.xlu0 0
  %269 = vperm.xlu0 %268, %v255
  %v270 = vpop.permute.xlu0 %269
  %273 = vset.pattern.permute.xlu0 0
  %274 = vperm.xlu0 %273, %v256
  %v275 = vpop.permute.xlu0 %274
  %v278 = vsel %vm195, %v249, 0
  %v281 = vsel %vm195, %v250, 0
  %v284 = vsel %vm195, %v251, 0
  %v287 = vsel %vm195, %v252, 0
  %289 = vmatpush.msra.mxu0 0.0
  %290 = vmatpush.msra.mxu0 0.0
  %291 = vmatpush.msra.mxu0 0.0
  %292 = vmatpush.msra.mxu0 0.0
  %293 = vmatpush.msra.mxu0 0.0
  %294 = vmatpush.msra.mxu0 0.0
  %295 = vmatpush.msra.mxu0 0.0
  %296 = vmatpush.msra.mxu0 0.0
  %297 = vmatpush.msra.mxu0 0.0
  %298 = vmatpush.msra.mxu0 0.0
  %299 = vmatpush.msra.mxu0 0.0
  %300 = vmatpush.msra.mxu0 0.0
  %301 = vmatpush.msra.mxu0 %v248
  %302 = vmatpush.msra.mxu0 %v247
  %303 = vmatpush.msra.mxu0 %v246
  %304 = vmatpush.msra.mxu0 %v245
  %305 = vmatmul.f32.gmra.mxu0 %v278
  %v306 = vpop.f32.mrf.mxu0
  %v307 = vadd.f32 %v260, %v306
  %308 = vmatmul.f32.gmra.mxu0 %v281
  %v309 = vpop.f32.mrf.mxu0
  %v310 = vadd.f32 %v265, %v309
  %311 = vmatmul.f32.gmra.mxu0 %v284
  %v312 = vpop.f32.mrf.mxu0
  %v313 = vadd.f32 %v270, %v312
  %314 = vmatmul.f32.gmra.mxu0 %v287
  %v315 = vpop.f32.mrf.mxu0
  %v316 = vadd.f32 %v275, %v315
  %317 = vdwg.mxu0
  %vm318 = vcmp.gt.f32.partialorder %v307, 0.0
  %vm319 = vcmp.gt.f32.partialorder %v310, 0.0
  %vm320 = vcmp.gt.f32.partialorder %v313, 0.0
  %vm321 = vcmp.gt.f32.partialorder %v316, 0.0
  %v322 = vmul.f32 %v307, 0.2
  %v323 = vmul.f32 %v310, 0.2
  %v324 = vmul.f32 %v313, 0.2
  %v325 = vmul.f32 %v316, 0.2
  %v326 = vsel %vm318, %v307, %v322
  %v327 = vsel %vm319, %v310, %v323
  %v328 = vsel %vm320, %v313, %v324
  %v329 = vsel %vm321, %v316, %v325
  %v330 = vld [vmem:[%s9] sm:$0xff]
  %v331 = vld [vmem:[%s9 + $0x8] sm:$0xff]
  %v332 = vld [vmem:[%s9 + $0x10] sm:$0xff]
  %v333 = vld [vmem:[%s9 + $0x18] sm:$0xff]
  %v334 = vld [vmem:[%s10] sm:$0xff]
  %v335 = vld [vmem:[%s10 + $0x8] sm:$0xff]
  %v336 = vld [vmem:[%s10 + $0x10] sm:$0xff]
  %v337 = vld [vmem:[%s10 + $0x18] sm:$0xff]
  %339 = vset.pattern.permute.xlu0 0
  %340 = vperm.xlu0 %339, %v334
  %v341 = vpop.permute.xlu0 %340
  %344 = vset.pattern.permute.xlu0 0
  %345 = vperm.xlu0 %344, %v335
  %v346 = vpop.permute.xlu0 %345
  %349 = vset.pattern.permute.xlu0 0
  %350 = vperm.xlu0 %349, %v336
  %v351 = vpop.permute.xlu0 %350
  %354 = vset.pattern.permute.xlu0 0
  %355 = vperm.xlu0 %354, %v337
  %v356 = vpop.permute.xlu0 %355
  %v359 = vsel %vm195, %v330, 0
  %v362 = vsel %vm195, %v331, 0
  %v365 = vsel %vm195, %v332, 0
  %v368 = vsel %vm195, %v333, 0
  %370 = vmatpush.msra.mxu0 0.0
  %371 = vmatpush.msra.mxu0 0.0
  %372 = vmatpush.msra.mxu0 0.0
  %373 = vmatpush.msra.mxu0 0.0
  %374 = vmatpush.msra.mxu0 0.0
  %375 = vmatpush.msra.mxu0 0.0
  %376 = vmatpush.msra.mxu0 0.0
  %377 = vmatpush.msra.mxu0 0.0
  %378 = vmatpush.msra.mxu0 0.0
  %379 = vmatpush.msra.mxu0 0.0
  %380 = vmatpush.msra.mxu0 0.0
  %381 = vmatpush.msra.mxu0 0.0
  %382 = vmatpush.msra.mxu0 %v329
  %383 = vmatpush.msra.mxu0 %v328
  %384 = vmatpush.msra.mxu0 %v327
  %385 = vmatpush.msra.mxu0 %v326
  %386 = vmatmul.f32.gmra.mxu0 %v359
  %v387 = vpop.f32.mrf.mxu0
  %v388 = vadd.f32 %v341, %v387
  %389 = vmatmul.f32.gmra.mxu0 %v362
  %v390 = vpop.f32.mrf.mxu0
  %v391 = vadd.f32 %v346, %v390
  %392 = vmatmul.f32.gmra.mxu0 %v365
  %v393 = vpop.f32.mrf.mxu0
  %v394 = vadd.f32 %v351, %v393
  %395 = vmatmul.f32.gmra.mxu0 %v368
  %v396 = vpop.f32.mrf.mxu0
  %v397 = vadd.f32 %v356, %v396
  %398 = vdwg.mxu0
  %vm399 = vcmp.gt.f32.partialorder %v388, 0.0
  %vm400 = vcmp.gt.f32.partialorder %v391, 0.0
  %vm401 = vcmp.gt.f32.partialorder %v394, 0.0
  %vm402 = vcmp.gt.f32.partialorder %v397, 0.0
  %v403 = vmul.f32 %v388, 0.2
  %v404 = vmul.f32 %v391, 0.2
  %v405 = vmul.f32 %v394, 0.2
  %v406 = vmul.f32 %v397, 0.2
  %v407 = vsel %vm399, %v388, %v403
  %v408 = vsel %vm400, %v391, %v404
  %v409 = vsel %vm401, %v394, %v405
  %v410 = vsel %vm402, %v397, %v406
  %v411 = vld [vmem:[%s11] sm:$0xf]
  %v412 = vld [vmem:[%s12] sm:$0xf]
  %414 = vset.pattern.permute.xlu0 0
  %415 = vperm.xlu0 %414, %v412
  %v416 = vpop.permute.xlu0 %415
  %v419 = vsel %vm195, %v411, 0
  %421 = vmatpush.msra.mxu0 0.0
  %422 = vmatpush.msra.mxu0 0.0
  %423 = vmatpush.msra.mxu0 0.0
  %424 = vmatpush.msra.mxu0 0.0
  %425 = vmatpush.msra.mxu0 0.0
  %426 = vmatpush.msra.mxu0 0.0
  %427 = vmatpush.msra.mxu0 0.0
  %428 = vmatpush.msra.mxu0 0.0
  %429 = vmatpush.msra.mxu0 0.0
  %430 = vmatpush.msra.mxu0 0.0
  %431 = vmatpush.msra.mxu0 0.0
  %432 = vmatpush.msra.mxu0 0.0
  %433 = vmatpush.msra.mxu0 %v410
  %434 = vmatpush.msra.mxu0 %v409
  %435 = vmatpush.msra.mxu0 %v408
  %436 = vmatpush.msra.mxu0 %v407
  %437 = vmatmul.f32.gmra.mxu0 %v419
  %v438 = vpop.f32.mrf.mxu0
  %v439 = vadd.f32 %v416, %v438
  %440 = vdwg.mxu0
  %441 = vst [vmem:[%s13] sm:$0xf] %v439
  // Predicated region
  $region54: #{generator_forward.1} parent=0 // pred_check
    _
  $region55: #{generator_forward.1} parent=0 // pred_check_branch
    %443 = sbr.rel (0) target = $region57
  $region56: #{generator_forward.1} parent=0 // pred_region
    _
  $region57: #{generator_forward.1} parent=0 // pred_fallthru
    _
  // Predicated region
  $region58: #{generator_forward.1} parent=0 // pred_check
    _
  $region59: #{generator_forward.1} parent=0 // pred_check_branch
    %445 = sbr.rel (0) target = $region61
  $region60: #{generator_forward.1} parent=0 // pred_region
    _
  $region61: #{generator_forward.1} parent=0 // pred_fallthru
    _

</llo_original>
